<compile_context>
chip_gen: v6e
topology: v6e:2x2x1
jax: 0.10.0
libtpu: 0.0.40
codegen_flags: <defaults>
</compile_context>

<pallas_src>
import functools

import jax
import jax.numpy as jnp
from jax.experimental import pallas as pl
from jax.experimental.pallas import tpu as pltpu


def _copy_kernel(x_ref, o_ref):
    # Identity copy of the current (TR, C) tile.
    o_ref[...] = x_ref[...]


def _tpu_generation() -> str:
    try:
        kind = jax.devices()[0].device_kind.lower()
    except Exception:  # pragma: no cover - defensive
        return "unknown"
    if "v7" in kind:
        return "v7"
    if "v6" in kind:
        return "v6"
    if "v5" in kind:
        return "v5"
    return "unknown"


# (target_tile_bytes, vmem_limit_bytes) per generation.  A tile is
# double-buffered for input AND output => ~4x the tile lives in VMEM, plus
# Mosaic internal scratch, so the limits leave headroom.
_GEN_PARAMS = {
    "v7": (8 << 20, 48 << 20),      # 32 MiB of buffers, < 64 MiB/TC physical VMEM
    "v6": (8 << 20, 64 << 20),      # 128 MiB physical VMEM
    "v5": (4 << 20, 32 << 20),      # default scope is 16 MiB; raise it explicitly
    "unknown": (4 << 20, 32 << 20),
}


def _choose_lane_width(total: int):
    """Widest lane-dense last dim (multiple of 128, <= 4096) that divides total."""
    for c in (4096, 2048, 1024, 512, 384, 256, 128):
        if total % c == 0:
            return c
    return None


def _sublane_multiple(dtype) -> int:
    """Native sublane packing: f32 -> 8, bf16/f16 -> 16, int8/fp8 -> 32."""
    itemsize = jnp.dtype(dtype).itemsize
    return max(8, 32 // max(1, itemsize))


def _choose_tile_rows(r: int, c: int, itemsize: int, target_tile_bytes: int,
                      sub: int, prefer_even_tiles: bool) -> int:
    """Row-tile size: multiple of the dtype's sublane pack, near target_tile_bytes,
    preferring an exact divisor of r (no masked partial block) and, on v7x, an
    even tile count for the two TensorCores."""
    bytes_per_row = c * itemsize
    tr_target = max(1, target_tile_bytes // bytes_per_row)
    if r <= tr_target:
        return r                                   # single full-extent block (always legal)
    tr_target = max(sub, (tr_target // sub) * sub)
    lo = max(sub, ((tr_target // 2) // sub) * sub)

    best, best_score = tr_target, (-1, -1, 0)
    t = tr_target
    while t >= lo:
        n_tiles = -(-r // t)
        divides = 1 if (r % t == 0) else 0
        even_ok = 1 if (not prefer_even_tiles or n_tiles == 1 or n_tiles % 2 == 0) else 0
        score = (divides, even_ok, t)              # exact divisor > even split > bigger tile
        if score > best_score:
            best, best_score = t, score
        t -= sub
    return min(best, r)


def _pallas_passthrough(x: jax.Array, *, target_tile_bytes=None,
                        vmem_limit_bytes=None, min_bytes: int = 1 << 20,
                        donate: bool = False) -> jax.Array:
    """Stream x through VMEM with a tiled, pipelined identity copy.

    Returns a flat (R, C) array with x's elements in row-major order, or x
    unchanged when the copy would be ragged or smaller than min_bytes
    (reshape is metadata-only, so skipping is always semantically correct).
    """
    total = x.size
    itemsize = jnp.dtype(x.dtype).itemsize
    c = _choose_lane_width(total)
    if c is None or total * itemsize < min_bytes:
        return x

    gen = _tpu_generation()
    gen_tile, gen_vmem = _GEN_PARAMS[gen]
    if target_tile_bytes is None:
        target_tile_bytes = gen_tile
    if vmem_limit_bytes is None:
        vmem_limit_bytes = gen_vmem

    r = total // c
    flat = jnp.reshape(x, (r, c))
    sub = _sublane_multiple(x.dtype)
    tr = _choose_tile_rows(r, c, itemsize, target_tile_bytes, sub,
                           prefer_even_tiles=(gen == "v7"))
    grid = (pl.cdiv(r, tr),)

    extra = {}
    if donate:
        # In-place writeback when the caller donates at the jit boundary.
        extra["input_output_aliases"] = {0: 0}

    return pl.pallas_call(
        _copy_kernel,
        out_shape=jax.ShapeDtypeStruct((r, c), flat.dtype),
        grid=grid,
        in_specs=[pl.BlockSpec((tr, c), lambda i: (i, 0))],
        out_specs=pl.BlockSpec((tr, c), lambda i: (i, 0)),
        compiler_params=pltpu.CompilerParams(
            dimension_semantics=("parallel",),     # shard rows across TensorCores
            vmem_limit_bytes=vmem_limit_bytes,
        ),
        cost_estimate=pl.CostEstimate(
            flops=0, transcendentals=0, bytes_accessed=2 * total * itemsize),
        **extra,
    )(flat)


class ReshapeVector:
    """JAX/Pallas port of commons.torchx.nn.extras.util.ReshapeVector."""

    def __init__(self, shape=None, n_dims=0, use_pallas=False, donate=False,
                 min_bytes: int = 1 << 20):
        self.shape = list(shape) if shape else None
        self.n_dims = n_dims
        self.new_dims = [1] * n_dims if n_dims > 0 else [1] * -n_dims
        self.use_pallas = use_pallas
        self.donate = donate
        self.min_bytes = min_bytes

    def _target_shape(self, in_shape):
        if self.shape is not None:
            return [in_shape[0]] + self.shape
        elif self.n_dims > 0:
            return list(in_shape) + self.new_dims
        else:
            return self.new_dims + list(in_shape)

    def __call__(self, x: jax.Array) -> jax.Array:
        new_shape = self._target_shape(x.shape)
        if self.use_pallas:
            # Optional tiled VMEM pass-through (e.g. as a fusion anchor).
            x = _pallas_passthrough(x, donate=self.donate, min_bytes=self.min_bytes)
        # Row-major (C-contiguous) metadata reshape — identical to torch.reshape.
        return jnp.reshape(x, new_shape)


if __name__ == "__main__":
    key = jax.random.PRNGKey(0)
    k0, k1, k2 = jax.random.split(key, 3)
    x = jax.random.normal(k0, (2, 4, 16, 16), dtype=jnp.float32)  # NCHW

    ok = True

    # Case 1: explicit shape -> [B] + shape, routed through the Pallas pass-through
    # (min_bytes=0 so the small demo tensor still exercises the kernel).
    m1 = ReshapeVector(shape=[4, 256], use_pallas=True, min_bytes=0)
    y1 = jax.block_until_ready(m1(x))
    ref1 = jnp.reshape(x, (2, 4, 256))
    ok &= (y1.shape == (2, 4, 256)) and bool(jnp.array_equal(y1, ref1))

    # Case 2: n_dims > 0 -> append singleton dims (default zero-copy fast path).
    m2 = ReshapeVector(n_dims=2)
    y2 = jax.block_until_ready(m2(x))
    ref2 = jnp.reshape(x, (2, 4, 16, 16, 1, 1))
    ok &= (y2.shape == (2, 4, 16, 16, 1, 1)) and bool(jnp.array_equal(y2, ref2))

    # Case 3: n_dims < 0 -> prepend singleton dims (default zero-copy fast path).
    m3 = ReshapeVector(n_dims=-1)
    y3 = jax.block_until_ready(m3(x))
    ref3 = jnp.reshape(x, (1, 2, 4, 16, 16))
    ok &= (y3.shape == (1, 2, 4, 16, 16)) and bool(jnp.array_equal(y3, ref3))

    # Multi-block tiled grid of the pass-through: small tensor, forced-small tiles.
    xb = jax.random.normal(k1, (8, 16, 32, 32), dtype=jnp.float32)  # 512 KiB
    yb = jax.block_until_ready(
        _pallas_passthrough(xb, target_tile_bytes=128 * 1024, min_bytes=0))
    ok &= bool(jnp.array_equal(jnp.reshape(yb, xb.shape), xb))

    # Donated / aliased path: input_output_aliases={0: 0} under jit donation.
    xd = jax.random.normal(k2, (8, 16, 32, 32), dtype=jnp.float32)
    donated_fn = jax.jit(
        functools.partial(_pallas_passthrough, target_tile_bytes=128 * 1024,
                          min_bytes=0, donate=True),
        donate_argnums=(0,))
    yd = jax.block_until_ready(donated_fn(xd))
    xd_ref = jax.random.normal(k2, (8, 16, 32, 32), dtype=jnp.float32)  # regenerate
    ok &= bool(jnp.array_equal(jnp.reshape(yd, xd_ref.shape), xd_ref))

    if ok:
        print("KERNEL_OK")
    else:
        raise SystemExit("mismatch vs reference reshape")
</pallas_src>

<mosaic_0001>
module attributes {stable_mosaic.version = 11 : i64} {
  func.func @_copy_kernel(%arg0: i32, %arg1: memref<1x2048xf32, #tpu.memory_space<vmem>>, %arg2: memref<1x2048xf32, #tpu.memory_space<vmem>>) attributes {dimension_semantics = [#tpu.dimension_semantics<parallel>], iteration_bounds = array<i64: 1>, scalar_prefetch = 0 : i64, scratch_operands = 0 : i64, tpu.core_type = #tpu.core_type<tc>, window_params = [{transform_indices = @transform_0, window_bounds = array<i64: 1, 2048>}, {transform_indices = @transform_1, window_bounds = array<i64: 1, 2048>}]} {
    %c0 = arith.constant 0 : index
    %c0_0 = arith.constant 0 : index
    %0 = vector.load %arg1[%c0, %c0_0] : memref<1x2048xf32, #tpu.memory_space<vmem>>, vector<1x2048xf32>
    %c0_1 = arith.constant 0 : index
    %c0_2 = arith.constant 0 : index
    %1 = vector.load %arg2[%c0_1, %c0_2] : memref<1x2048xf32, #tpu.memory_space<vmem>>, vector<1x2048xf32>
    tpu.vector_store %arg2[%c0_1, %c0_2], %0 {strides = array<i32>} : memref<1x2048xf32, #tpu.memory_space<vmem>>, vector<1x2048xf32>,
    return
  }
  func.func @transform_0(%arg0: i32) -> (i32, i32) {
    %c0_i32 = arith.constant 0 : i32
    %c0_i32_0 = arith.constant 0 : i32
    return %arg0, %c0_i32 : i32, i32
  }
  func.func @transform_1(%arg0: i32) -> (i32, i32) {
    %c0_i32 = arith.constant 0 : i32
    %c0_i32_0 = arith.constant 0 : i32
    return %arg0, %c0_i32 : i32, i32
  }
}

</mosaic_0001>

<llo_original>
// kernel: tpu_custom_call.1
$region0: #{tpu_custom_call.1}
  #allocation0 [shape = 'u32[]', space=smem, size = 0x4, offset = 0x4, fixed_abs, tag = 'smem constant byte address 0x4 - core index']
  #allocation1 [shape = 'u32[144,128]{1,0:T(1,128)}', space=vmem, size = 0x12000, scoped, tag = 'internal scratch']
  %s0 = inlined_call_operand.hbm [shape: f32[1,2048], index: 0, kind: input, shape index: {}]
  %s1 = inlined_call_operand.hbm [shape: f32[1,2048], index: 1, kind: output, shape index: {}]
  %s2 = sld [smem:[#allocation0]]
  $region18: #{tpu_custom_call.1} parent=0
    _
  %s4 = ssub.s32 1, %s2
  %s5 = scalar_select 0, %s4, %s2
  $region1: #{tpu_custom_call.1} parent=0
    #allocation2 [shape = 'u8[8192]{0}', space=vmem, size = 0x2000, scoped, tag = 'input window, operand 0, single buffered']
    #allocation3 [shape = 's32[1]{0}', space=sflag, size = 0x4, scoped, tag = 'scoped memory for tpu_custom_call.1']
    #allocation4 [shape = 's32[1]{0}', space=sflag, size = 0x4, scoped, tag = 'scoped memory for tpu_custom_call.1']
    #allocation5 [shape = 'u8[8192]{0}', space=vmem, size = 0x2000, scoped, tag = 'output window, operand 0, single buffered']
    %6 = vsyncpa [#allocation3], 0
    %7 = vsyncpa [#allocation4], 0
    // Predicated region
    $region2: #{tpu_custom_call.1} parent=1 // pred_check
      _
    $region3: #{tpu_custom_call.1} parent=1 // pred_check_branch
      %9 = sbr.rel (0) target = $region5
    $region4: #{tpu_custom_call.1} parent=1 // pred_region
      %s11 = ssub.s32 256, 256
      %12 = vsyncadd [#allocation3], %s11
      %s14 = sshll.u32 [#allocation2], 4
      %s15 = int_to_ptr.vmem [resolvable:$true] %s14
      %17 = dma.hbm_to_vmem [thread:$0]  %s0, 256, %s15, [#allocation3]
    $region5: #{tpu_custom_call.1} parent=1 // pred_fallthru
      _
    // Predicated region
    $region6: #{tpu_custom_call.1} parent=1 // pred_check
      _
    $region7: #{tpu_custom_call.1} parent=1 // pred_check_branch
      %19 = sbr.rel (0) target = $region9
    $region8: #{tpu_custom_call.1} parent=1 // pred_region
      %20 = dma.done [#allocation3], 256
    $region9: #{tpu_custom_call.1} parent=1 // pred_fallthru
      _
    %v21 = vld [vmem:[#allocation2] sm:$0xff]
    %v22 = vld [vmem:[#allocation2 + $0x8] sm:$0xff]
    %23 = vst [vmem:[#allocation5] sm:$0xff] %v21
    %24 = vst [vmem:[#allocation5 + $0x8] sm:$0xff] %v22
    // Predicated region
    $region10: #{tpu_custom_call.1} parent=1 // pred_check
      _
    $region11: #{tpu_custom_call.1} parent=1 // pred_check_branch
      %26 = sbr.rel (0) target = $region13
    $region12: #{tpu_custom_call.1} parent=1 // pred_region
      %s28 = ssub.s32 256, 256
      %29 = vsyncadd [#allocation4], %s28
      %s31 = sshll.u32 [#allocation5], 4
      %s32 = int_to_ptr.vmem [resolvable:$true] %s31
      %34 = dma.vmem_to_hbm [thread:$0]  %s32, 256, %s1, [#allocation4]
    $region13: #{tpu_custom_call.1} parent=1 // pred_fallthru
      _
    // Predicated region
    $region14: #{tpu_custom_call.1} parent=1 // pred_check
      _
    $region15: #{tpu_custom_call.1} parent=1 // pred_check_branch
      %36 = sbr.rel (0) target = $region17
    $region16: #{tpu_custom_call.1} parent=1 // pred_region
      %37 = dma.done [#allocation4], 256
    $region17: #{tpu_custom_call.1} parent=1 // pred_fallthru
      _
    %38 = vsyncpa [#allocation3], 1
    %39 = vsyncpa [#allocation4], 1

</llo_original>
